<compile_context>
chip_gen: v5e
topology: v5e:2x2
jax: 0.10.0
libtpu: 0.0.40
codegen_flags: <defaults>
</compile_context>

<pallas_src>
import functools

import jax
import jax.numpy as jnp
from jax import lax
from jax.experimental import pallas as pl
from jax.experimental.pallas import tpu as pltpu


def mha_kernel(x_ref, wqkv_ref, wo_ref, bo_ref, o_ref, qkv_scr, ctx_scr, *,
               num_heads, head_dim, seq_len, batch_tile, kv_tile):
    T, H, hd = seq_len, num_heads, head_dim
    E = H * hd
    Bt = batch_tile
    num_kt = T // kv_tile
    cdt = x_ref.dtype                     # matmul operand dtype (bfloat16)

    # ---- fused QKV projection over all Bt*T rows (one MXU matmul) ----------
    qkv = jnp.dot(x_ref[...], wqkv_ref[...],
                  preferred_element_type=jnp.float32)          # (Bt*T, 3E) f32
    qkv_scr[...] = qkv.astype(cdt)        # single up-front cast to bf16 scratch

    neg_big = jnp.float32(-1e30)          # finite sentinel: causal rows always
                                          # have >= 1 unmasked key, so no NaNs

    # Attention is independent per batch element; a real loop (not a static
    # unroll) bounds live vregs/VMEM to one batch element.
    @pl.loop(0, Bt)
    def _(b):
        row0 = pl.multiple_of(b * T, T)

        for h in range(H):                                    # static over heads
            q_h = qkv_scr[pl.ds(row0, T), h * hd:(h + 1) * hd]        # (T, hd)

            m = l = acc = None
            # Key-tiled online softmax (flash style); static unroll over tiles.
            for kt in range(num_kt):
                k0 = kt * kv_tile
                k_t = qkv_scr[pl.ds(row0 + k0, kv_tile),
                              E + h * hd:E + (h + 1) * hd]            # (tk, hd)
                v_t = qkv_scr[pl.ds(row0 + k0, kv_tile),
                              2 * E + h * hd:2 * E + (h + 1) * hd]    # (tk, hd)

                # contract last dims: no transpose of k needed
                s = lax.dot_general(q_h, k_t, (((1,), (1,)), ((), ())),
                                    preferred_element_type=jnp.float32)  # (T, tk)

                # causal mask, rebuilt per key tile from iotas (keeps VMEM flat
                # instead of holding a (T, T) mask live across the kernel)
                qidx = lax.broadcasted_iota(jnp.int32, (T, kv_tile), 0)
                kidx = lax.broadcasted_iota(jnp.int32, (T, kv_tile), 1) + k0
                s = jnp.where(kidx > qidx, neg_big, s)

                if kt == 0:
                    m = jnp.max(s, axis=-1, keepdims=True)
                    p = jnp.exp(s - m)
                    l = jnp.sum(p, axis=-1, keepdims=True)
                    acc = jnp.dot(p.astype(cdt), v_t,
                                  preferred_element_type=jnp.float32)
                else:
                    m_new = jnp.maximum(m, jnp.max(s, axis=-1, keepdims=True))
                    alpha = jnp.exp(m - m_new)
                    p = jnp.exp(s - m_new)
                    l = alpha * l + jnp.sum(p, axis=-1, keepdims=True)
                    acc = alpha * acc + jnp.dot(p.astype(cdt), v_t,
                                                preferred_element_type=jnp.float32)
                    m = m_new

            # softmax denom via EUP reciprocal (approx -> ~1e-3 rel err, within
            # the bf16-level tolerance of this kernel)
            ctx_h = acc * pl.reciprocal(l, approx=True)
            ctx_scr[pl.ds(row0, T), h * hd:(h + 1) * hd] = ctx_h.astype(cdt)

    # ---- output projection (one matmul over Bt*T rows) + bias --------------
    out = jnp.dot(ctx_scr[...], wo_ref[...], preferred_element_type=jnp.float32)
    o_ref[...] = (out + bo_ref[...]).astype(o_ref.dtype)


def _step_vmem_bytes(bt, T, E, out_itemsize, compute_itemsize=2):
    """Rough per-grid-step VMEM footprint estimate (bytes)."""
    rows = bt * T
    weights = (E * 3 * E + E * E) * compute_itemsize + E * 4   # single-buffered
    io = 2 * rows * E * compute_itemsize + 2 * rows * E * out_itemsize  # x/out dbl-buf
    scratch = rows * 4 * E * compute_itemsize                  # qkv + ctx scratch
    transient = rows * 3 * E * 4                               # f32 qkv matmul result
    return weights + io + scratch + transient


def _pick_batch_tile(B, T, E, out_itemsize, *, target_m=256, max_m=1024,
                     vmem_budget_bytes=48 << 20):
    """Largest divisor of B fitting the VMEM budget; prefers MXU-friendly
    (multiple-of-256) row counts and keeps >= 2 grid steps when B > 1 so both
    v7x TensorCores get work."""
    divisors = [d for d in range(1, B + 1) if B % d == 0]
    cands = [d for d in divisors
             if d * T <= max_m
             and _step_vmem_bytes(d, T, E, out_itemsize) <= vmem_budget_bytes
             and (B // d >= 2 or B == 1)]
    if not cands:
        return 1

    def score(d):
        rows = d * T
        align = 2 if rows % 256 == 0 else (1 if rows % 128 == 0 else 0)
        return (rows >= target_m, align, rows)

    return max(cands, key=score)


def _pick_kv_tile(T, max_tile=512):
    """Largest divisor of T that is <= max_tile (key-tile for online softmax)."""
    if T <= max_tile:
        return T
    best = 1
    for t in range(max_tile, 0, -1):
        if T % t == 0:
            best = t
            break
    # TODO(synk): support a ragged last key tile instead of falling back to T.
    return best if best >= 128 else T


def multi_head_attention(x, wq, wk, wv, wo, bo, *, num_heads,
                         compute_dtype=jnp.bfloat16):
    """First-call (empty KV cache) forward of the PyTorch MultiHeadAttention."""
    B, T, E = x.shape
    assert E % num_heads == 0
    head_dim = E // num_heads
    scale = 1.0 / (head_dim ** 0.5)

    # PyTorch nn.Linear stores (out, in): pre-transpose to (in, out), fuse Q/K/V
    # into one (E, 3E) weight and fold the softmax scale into the Q columns.
    wqkv = jnp.concatenate([wq.T * scale, wk.T, wv.T], axis=1).astype(compute_dtype)
    wo_t = wo.T.astype(compute_dtype)                                   # (E, E)
    bo2d = bo.reshape(1, E).astype(jnp.float32)

    # 2-D (B*T, E) view: no in-kernel reshapes, lane-dense output stores.
    x2 = x.reshape(B * T, E).astype(compute_dtype)

    out_itemsize = jnp.dtype(x.dtype).itemsize
    kv_tile = _pick_kv_tile(T)
    Bt = _pick_batch_tile(B, T, E, out_itemsize)
    est = _step_vmem_bytes(Bt, T, E, out_itemsize)
    vmem_limit = int(min(60 << 20, max(32 << 20, est * 5 // 4)))

    kernel = functools.partial(mha_kernel, num_heads=num_heads, head_dim=head_dim,
                               seq_len=T, batch_tile=Bt, kv_tile=kv_tile)

    # Grid-invariant weights: constant index_map => never refetched, so a
    # single buffer suffices (halves their VMEM footprint vs default).
    w_buf = pl.Buffered(1)

    # TODO(synk): for very large E (fused weight > VMEM), add a head-group grid
    # axis that tiles wqkv columns / wo rows and accumulates the output proj.
    out2 = pl.pallas_call(
        kernel,
        out_shape=jax.ShapeDtypeStruct((B * T, E), x.dtype),
        grid_spec=pltpu.PrefetchScalarGridSpec(
            num_scalar_prefetch=0,
            grid=(B // Bt,),
            in_specs=[
                pl.BlockSpec((Bt * T, E), lambda b: (b, 0)),                 # x
                pl.BlockSpec((E, 3 * E), lambda b: (0, 0), pipeline_mode=w_buf),
                pl.BlockSpec((E, E), lambda b: (0, 0), pipeline_mode=w_buf),
                pl.BlockSpec((1, E), lambda b: (0, 0), pipeline_mode=w_buf),
            ],
            out_specs=pl.BlockSpec((Bt * T, E), lambda b: (b, 0)),
            scratch_shapes=[
                pltpu.VMEM((Bt * T, 3 * E), compute_dtype),   # bf16 qkv
                pltpu.VMEM((Bt * T, E), compute_dtype),       # bf16 context
            ],
        ),
        compiler_params=pltpu.CompilerParams(
            dimension_semantics=("parallel",),
            vmem_limit_bytes=vmem_limit,
        ),
    )(x2, wqkv, wo_t, bo2d)
    return out2.reshape(B, T, E)


def reference(x, wq, wk, wv, wo, bo, *, num_heads):
    """Pure-JAX float32 mirror of the PyTorch forward (first call, eval mode)."""
    B, T, E = x.shape
    hd = E // num_heads
    q = x @ wq.T
    k = x @ wk.T
    v = x @ wv.T
    q = q.reshape(B, T, num_heads, hd).transpose(0, 2, 1, 3)
    k = k.reshape(B, T, num_heads, hd).transpose(0, 2, 1, 3)
    v = v.reshape(B, T, num_heads, hd).transpose(0, 2, 1, 3)
    scores = jnp.einsum('bhqd,bhkd->bhqk', q, k)
    mask = jnp.triu(jnp.ones((T, T), dtype=bool), k=1)
    scores = jnp.where(mask[None, None], -jnp.inf, scores)
    attn = jax.nn.softmax(scores / (hd ** 0.5), axis=-1)
    ctx = jnp.einsum('bhqk,bhkd->bhqd', attn, v)
    ctx = ctx.transpose(0, 2, 1, 3).reshape(B, T, E)
    return ctx @ wo.T + bo


if __name__ == "__main__":
    B, T, E, H = 2, 8, 32, 4          # contextLength == T for this example
    key = jax.random.PRNGKey(0)
    kx, k1, k2, k3, k4, k5 = jax.random.split(key, 6)

    bound = 1.0 / (E ** 0.5)
    x  = jax.random.normal(kx, (B, T, E), dtype=jnp.float32)
    wq = jax.random.uniform(k1, (E, E), jnp.float32, -bound, bound)
    wk = jax.random.uniform(k2, (E, E), jnp.float32, -bound, bound)
    wv = jax.random.uniform(k3, (E, E), jnp.float32, -bound, bound)
    wo = jax.random.uniform(k4, (E, E), jnp.float32, -bound, bound)
    bo = jax.random.uniform(k5, (E,),  jnp.float32, -bound, bound)

    out = multi_head_attention(x, wq, wk, wv, wo, bo, num_heads=H)
    out = jax.block_until_ready(out)

    ref = reference(x, wq, wk, wv, wo, bo, num_heads=H)
    assert out.shape == (B, T, E)
    # bf16 matmul operands (f32 accumulation / f32 online softmax) => bf16 tol.
    assert jnp.allclose(out, ref, atol=5e-2, rtol=5e-2), (
        f"max abs err {jnp.max(jnp.abs(out - ref))}")

    print("KERNEL_OK")
</pallas_src>

<mosaic_0001>
module attributes {stable_mosaic.version = 11 : i64} {
  func.func @mha_kernel(%arg0: i32, %arg1: memref<8x32xbf16, #tpu.memory_space<vmem>>, %arg2: memref<32x96xbf16, #tpu.memory_space<vmem>>, %arg3: memref<32x32xbf16, #tpu.memory_space<vmem>>, %arg4: memref<1x32xf32, #tpu.memory_space<vmem>>, %arg5: memref<8x32xf32, #tpu.memory_space<vmem>>, %arg6: memref<8x96xbf16, #tpu.memory_space<vmem>>, %arg7: memref<8x32xbf16, #tpu.memory_space<vmem>>) attributes {dimension_semantics = [#tpu.dimension_semantics<parallel>], iteration_bounds = array<i64: 2>, scalar_prefetch = 0 : i64, scratch_operands = 2 : i64, tpu.core_type = #tpu.core_type<tc>, window_params = [{transform_indices = @transform_0, window_bounds = array<i64: 8, 32>}, {pipeline_mode = #tpu.pipeline_mode<synchronous>, transform_indices = @transform_1, window_bounds = array<i64: 32, 96>}, {pipeline_mode = #tpu.pipeline_mode<synchronous>, transform_indices = @transform_2, window_bounds = array<i64: 32, 32>}, {pipeline_mode = #tpu.pipeline_mode<synchronous>, transform_indices = @transform_3, window_bounds = array<i64: 1, 32>}, {transform_indices = @transform_4, window_bounds = array<i64: 8, 32>}]} {
    %c0 = arith.constant 0 : index
    %c0_0 = arith.constant 0 : index
    %0 = vector.load %arg1[%c0, %c0_0] : memref<8x32xbf16, #tpu.memory_space<vmem>>, vector<8x32xbf16>
    %c0_1 = arith.constant 0 : index
    %c0_2 = arith.constant 0 : index
    %1 = vector.load %arg2[%c0_1, %c0_2] : memref<32x96xbf16, #tpu.memory_space<vmem>>, vector<32x96xbf16>
    %cst = arith.constant dense<0.000000e+00> : vector<8x96xf32>
    %2 = tpu.matmul %0, %1, %cst {dimension_numbers = #tpu.dot_dimension_numbers<[1], [0], [0], [1], [0, 0, 1, 1], [], []>} : vector<8x32xbf16>, vector<32x96xbf16>, vector<8x96xf32> -> vector<8x96xf32>
    %3 = arith.truncf %2 : vector<8x96xf32> to vector<8x96xbf16>
    %c0_3 = arith.constant 0 : index
    %c0_4 = arith.constant 0 : index
    %4 = vector.load %arg6[%c0_3, %c0_4] : memref<8x96xbf16, #tpu.memory_space<vmem>>, vector<8x96xbf16>
    tpu.vector_store %arg6[%c0_3, %c0_4], %3 {strides = array<i32>} : memref<8x96xbf16, #tpu.memory_space<vmem>>, vector<8x96xbf16>,
    %cst_5 = arith.constant -1.000000e+30 : f32
    %c0_i32 = arith.constant 0 : i32
    %c1_i32 = arith.constant 1 : i32
    %5 = arith.muli %c0_i32, %c1_i32 : i32
    %c0_i32_6 = arith.constant 0 : i32
    %6 = arith.addi %c0_i32_6, %5 : i32
    %c8_i32 = arith.constant 8 : i32
    %7 = arith.muli %6, %c8_i32 : i32
    %8 = tpu.assume_multiple %7, 8 : i32
    %9 = arith.index_cast %8 : i32 to index
    %c0_7 = arith.constant 0 : index
    %10 = vector.load %arg6[%9, %c0_7] : memref<8x96xbf16, #tpu.memory_space<vmem>>, vector<8x8xbf16>
    %c0_i32_8 = arith.constant 0 : i32
    %11 = arith.addi %8, %c0_i32_8 : i32
    %12 = arith.index_cast %11 : i32 to index
    %c32 = arith.constant 32 : index
    %13 = vector.load %arg6[%12, %c32] : memref<8x96xbf16, #tpu.memory_space<vmem>>, vector<8x8xbf16>
    %c0_i32_9 = arith.constant 0 : i32
    %14 = arith.addi %8, %c0_i32_9 : i32
    %15 = arith.index_cast %14 : i32 to index
    %c64 = arith.constant 64 : index
    %16 = vector.load %arg6[%15, %c64] : memref<8x96xbf16, #tpu.memory_space<vmem>>, vector<8x8xbf16>
    %cst_10 = arith.constant dense<0.000000e+00> : vector<8x8xf32>
    %17 = tpu.matmul %10, %13, %cst_10 {dimension_numbers = #tpu.dot_dimension_numbers<[1], [1], [0], [0], [0, 0, 1, 0], [], []>} : vector<8x8xbf16>, vector<8x8xbf16>, vector<8x8xf32> -> vector<8x8xf32>
    %18 = tpu.iota {dimensions = array<i32: 0>} : vector<8x8xi32>
    %19 = tpu.iota {dimensions = array<i32: 1>} : vector<8x8xi32>
    %c0_i32_11 = arith.constant 0 : i32
    %20 = vector.broadcast %c0_i32_11 : i32 to vector<8x8xi32>
    %21 = arith.addi %19, %20 : vector<8x8xi32>
    %22 = arith.cmpi sgt, %21, %18 : vector<8x8xi32>
    %23 = vector.broadcast %cst_5 : f32 to vector<8x8xf32>
    %24 = arith.select %22, %23, %17 : vector<8x8xi1>, vector<8x8xf32>
    %cst_12 = arith.constant dense<0xFF800000> : vector<8xf32>
    %25 = vector.multi_reduction <maximumf>, %24, %cst_12 [1] : vector<8x8xf32> to vector<8xf32>
    %26 = vector.shape_cast %25 : vector<8xf32> to vector<8x1xf32>
    %27 = vector.broadcast %26 : vector<8x1xf32> to vector<8x8xf32>
    %28 = arith.subf %24, %27 : vector<8x8xf32>
    %29 = math.exp %28 : vector<8x8xf32>
    %cst_13 = arith.constant dense<0.000000e+00> : vector<8xf32>
    %30 = vector.multi_reduction <add>, %29, %cst_13 [1] : vector<8x8xf32> to vector<8xf32>
    %31 = vector.shape_cast %30 : vector<8xf32> to vector<8x1xf32>
    %32 = arith.truncf %29 : vector<8x8xf32> to vector<8x8xbf16>
    %cst_14 = arith.constant dense<0.000000e+00> : vector<8x8xf32>
    %33 = tpu.matmul %32, %16, %cst_14 {dimension_numbers = #tpu.dot_dimension_numbers<[1], [0], [0], [1], [0, 0, 1, 1], [], []>} : vector<8x8xbf16>, vector<8x8xbf16>, vector<8x8xf32> -> vector<8x8xf32>
    %34 = tpu.reciprocal %31 {approx = true} : vector<8x1xf32> -> vector<8x1xf32>
    %35 = vector.broadcast %34 : vector<8x1xf32> to vector<8x8xf32>
    %36 = arith.mulf %33, %35 : vector<8x8xf32>
    %37 = arith.truncf %36 : vector<8x8xf32> to vector<8x8xbf16>
    %38 = arith.index_cast %8 : i32 to index
    %c0_15 = arith.constant 0 : index
    %39 = vector.load %arg7[%38, %c0_15] : memref<8x32xbf16, #tpu.memory_space<vmem>>, vector<8x8xbf16>
    tpu.vector_store %arg7[%38, %c0_15], %37 {strides = array<i32>} : memref<8x32xbf16, #tpu.memory_space<vmem>>, vector<8x8xbf16>,
    %40 = arith.index_cast %8 : i32 to index
    %c8 = arith.constant 8 : index
    %41 = vector.load %arg6[%40, %c8] : memref<8x96xbf16, #tpu.memory_space<vmem>>, vector<8x8xbf16>
    %c0_i32_16 = arith.constant 0 : i32
    %42 = arith.addi %8, %c0_i32_16 : i32
    %43 = arith.index_cast %42 : i32 to index
    %c40 = arith.constant 40 : index
    %44 = vector.load %arg6[%43, %c40] : memref<8x96xbf16, #tpu.memory_space<vmem>>, vector<8x8xbf16>
    %c0_i32_17 = arith.constant 0 : i32
    %45 = arith.addi %8, %c0_i32_17 : i32
    %46 = arith.index_cast %45 : i32 to index
    %c72 = arith.constant 72 : index
    %47 = vector.load %arg6[%46, %c72] : memref<8x96xbf16, #tpu.memory_space<vmem>>, vector<8x8xbf16>
    %cst_18 = arith.constant dense<0.000000e+00> : vector<8x8xf32>
    %48 = tpu.matmul %41, %44, %cst_18 {dimension_numbers = #tpu.dot_dimension_numbers<[1], [1], [0], [0], [0, 0, 1, 0], [], []>} : vector<8x8xbf16>, vector<8x8xbf16>, vector<8x8xf32> -> vector<8x8xf32>
    %49 = tpu.iota {dimensions = array<i32: 0>} : vector<8x8xi32>
    %50 = tpu.iota {dimensions = array<i32: 1>} : vector<8x8xi32>
    %c0_i32_19 = arith.constant 0 : i32
    %51 = vector.broadcast %c0_i32_19 : i32 to vector<8x8xi32>
    %52 = arith.addi %50, %51 : vector<8x8xi32>
    %53 = arith.cmpi sgt, %52, %49 : vector<8x8xi32>
    %54 = vector.broadcast %cst_5 : f32 to vector<8x8xf32>
    %55 = arith.select %53, %54, %48 : vector<8x8xi1>, vector<8x8xf32>
    %cst_20 = arith.constant dense<0xFF800000> : vector<8xf32>
    %56 = vector.multi_reduction <maximumf>, %55, %cst_20 [1] : vector<8x8xf32> to vector<8xf32>
    %57 = vector.shape_cast %56 : vector<8xf32> to vector<8x1xf32>
    %58 = vector.broadcast %57 : vector<8x1xf32> to vector<8x8xf32>
    %59 = arith.subf %55, %58 : vector<8x8xf32>
    %60 = math.exp %59 : vector<8x8xf32>
    %cst_21 = arith.constant dense<0.000000e+00> : vector<8xf32>
    %61 = vector.multi_reduction <add>, %60, %cst_21 [1] : vector<8x8xf32> to vector<8xf32>
    %62 = vector.shape_cast %61 : vector<8xf32> to vector<8x1xf32>
    %63 = arith.truncf %60 : vector<8x8xf32> to vector<8x8xbf16>
    %cst_22 = arith.constant dense<0.000000e+00> : vector<8x8xf32>
    %64 = tpu.matmul %63, %47, %cst_22 {dimension_numbers = #tpu.dot_dimension_numbers<[1], [0], [0], [1], [0, 0, 1, 1], [], []>} : vector<8x8xbf16>, vector<8x8xbf16>, vector<8x8xf32> -> vector<8x8xf32>
    %65 = tpu.reciprocal %62 {approx = true} : vector<8x1xf32> -> vector<8x1xf32>
    %66 = vector.broadcast %65 : vector<8x1xf32> to vector<8x8xf32>
    %67 = arith.mulf %64, %66 : vector<8x8xf32>
    %68 = arith.truncf %67 : vector<8x8xf32> to vector<8x8xbf16>
    %69 = arith.index_cast %8 : i32 to index
    %c8_23 = arith.constant 8 : index
    %70 = vector.load %arg7[%69, %c8_23] : memref<8x32xbf16, #tpu.memory_space<vmem>>, vector<8x8xbf16>
    tpu.vector_store %arg7[%69, %c8_23], %68 {strides = array<i32>} : memref<8x32xbf16, #tpu.memory_space<vmem>>, vector<8x8xbf16>,
    %71 = arith.index_cast %8 : i32 to index
    %c16 = arith.constant 16 : index
    %72 = vector.load %arg6[%71, %c16] : memref<8x96xbf16, #tpu.memory_space<vmem>>, vector<8x8xbf16>
    %c0_i32_24 = arith.constant 0 : i32
    %73 = arith.addi %8, %c0_i32_24 : i32
    %74 = arith.index_cast %73 : i32 to index
    %c48 = arith.constant 48 : index
    %75 = vector.load %arg6[%74, %c48] : memref<8x96xbf16, #tpu.memory_space<vmem>>, vector<8x8xbf16>
    %c0_i32_25 = arith.constant 0 : i32
    %76 = arith.addi %8, %c0_i32_25 : i32
    %77 = arith.index_cast %76 : i32 to index
    %c80 = arith.constant 80 : index
    %78 = vector.load %arg6[%77, %c80] : memref<8x96xbf16, #tpu.memory_space<vmem>>, vector<8x8xbf16>
    %cst_26 = arith.constant dense<0.000000e+00> : vector<8x8xf32>
    %79 = tpu.matmul %72, %75, %cst_26 {dimension_numbers = #tpu.dot_dimension_numbers<[1], [1], [0], [0], [0, 0, 1, 0], [], []>} : vector<8x8xbf16>, vector<8x8xbf16>, vector<8x8xf32> -> vector<8x8xf32>
    %80 = tpu.iota {dimensions = array<i32: 0>} : vector<8x8xi32>
    %81 = tpu.iota {dimensions = array<i32: 1>} : vector<8x8xi32>
    %c0_i32_27 = arith.constant 0 : i32
    %82 = vector.broadcast %c0_i32_27 : i32 to vector<8x8xi32>
    %83 = arith.addi %81, %82 : vector<8x8xi32>
    %84 = arith.cmpi sgt, %83, %80 : vector<8x8xi32>
    %85 = vector.broadcast %cst_5 : f32 to vector<8x8xf32>
    %86 = arith.select %84, %85, %79 : vector<8x8xi1>, vector<8x8xf32>
    %cst_28 = arith.constant dense<0xFF800000> : vector<8xf32>
    %87 = vector.multi_reduction <maximumf>, %86, %cst_28 [1] : vector<8x8xf32> to vector<8xf32>
    %88 = vector.shape_cast %87 : vector<8xf32> to vector<8x1xf32>
    %89 = vector.broadcast %88 : vector<8x1xf32> to vector<8x8xf32>
    %90 = arith.subf %86, %89 : vector<8x8xf32>
    %91 = math.exp %90 : vector<8x8xf32>
    %cst_29 = arith.constant dense<0.000000e+00> : vector<8xf32>
    %92 = vector.multi_reduction <add>, %91, %cst_29 [1] : vector<8x8xf32> to vector<8xf32>
    %93 = vector.shape_cast %92 : vector<8xf32> to vector<8x1xf32>
    %94 = arith.truncf %91 : vector<8x8xf32> to vector<8x8xbf16>
    %cst_30 = arith.constant dense<0.000000e+00> : vector<8x8xf32>
    %95 = tpu.matmul %94, %78, %cst_30 {dimension_numbers = #tpu.dot_dimension_numbers<[1], [0], [0], [1], [0, 0, 1, 1], [], []>} : vector<8x8xbf16>, vector<8x8xbf16>, vector<8x8xf32> -> vector<8x8xf32>
    %96 = tpu.reciprocal %93 {approx = true} : vector<8x1xf32> -> vector<8x1xf32>
    %97 = vector.broadcast %96 : vector<8x1xf32> to vector<8x8xf32>
    %98 = arith.mulf %95, %97 : vector<8x8xf32>
    %99 = arith.truncf %98 : vector<8x8xf32> to vector<8x8xbf16>
    %100 = arith.index_cast %8 : i32 to index
    %c16_31 = arith.constant 16 : index
    %101 = vector.load %arg7[%100, %c16_31] : memref<8x32xbf16, #tpu.memory_space<vmem>>, vector<8x8xbf16>
    tpu.vector_store %arg7[%100, %c16_31], %99 {strides = array<i32>} : memref<8x32xbf16, #tpu.memory_space<vmem>>, vector<8x8xbf16>,
    %102 = arith.index_cast %8 : i32 to index
    %c24 = arith.constant 24 : index
    %103 = vector.load %arg6[%102, %c24] : memref<8x96xbf16, #tpu.memory_space<vmem>>, vector<8x8xbf16>
    %c0_i32_32 = arith.constant 0 : i32
    %104 = arith.addi %8, %c0_i32_32 : i32
    %105 = arith.index_cast %104 : i32 to index
    %c56 = arith.constant 56 : index
    %106 = vector.load %arg6[%105, %c56] : memref<8x96xbf16, #tpu.memory_space<vmem>>, vector<8x8xbf16>
    %c0_i32_33 = arith.constant 0 : i32
    %107 = arith.addi %8, %c0_i32_33 : i32
    %108 = arith.index_cast %107 : i32 to index
    %c88 = arith.constant 88 : index
    %109 = vector.load %arg6[%108, %c88] : memref<8x96xbf16, #tpu.memory_space<vmem>>, vector<8x8xbf16>
    %cst_34 = arith.constant dense<0.000000e+00> : vector<8x8xf32>
    %110 = tpu.matmul %103, %106, %cst_34 {dimension_numbers = #tpu.dot_dimension_numbers<[1], [1], [0], [0], [0, 0, 1, 0], [], []>} : vector<8x8xbf16>, vector<8x8xbf16>, vector<8x8xf32> -> vector<8x8xf32>
    %111 = tpu.iota {dimensions = array<i32: 0>} : vector<8x8xi32>
    %112 = tpu.iota {dimensions = array<i32: 1>} : vector<8x8xi32>
    %c0_i32_35 = arith.constant 0 : i32
    %113 = vector.broadcast %c0_i32_35 : i32 to vector<8x8xi32>
    %114 = arith.addi %112, %113 : vector<8x8xi32>
    %115 = arith.cmpi sgt, %114, %111 : vector<8x8xi32>
    %116 = vector.broadcast %cst_5 : f32 to vector<8x8xf32>
    %117 = arith.select %115, %116, %110 : vector<8x8xi1>, vector<8x8xf32>
    %cst_36 = arith.constant dense<0xFF800000> : vector<8xf32>
    %118 = vector.multi_reduction <maximumf>, %117, %cst_36 [1] : vector<8x8xf32> to vector<8xf32>
    %119 = vector.shape_cast %118 : vector<8xf32> to vector<8x1xf32>
    %120 = vector.broadcast %119 : vector<8x1xf32> to vector<8x8xf32>
    %121 = arith.subf %117, %120 : vector<8x8xf32>
    %122 = math.exp %121 : vector<8x8xf32>
    %cst_37 = arith.constant dense<0.000000e+00> : vector<8xf32>
    %123 = vector.multi_reduction <add>, %122, %cst_37 [1] : vector<8x8xf32> to vector<8xf32>
    %124 = vector.shape_cast %123 : vector<8xf32> to vector<8x1xf32>
    %125 = arith.truncf %122 : vector<8x8xf32> to vector<8x8xbf16>
    %cst_38 = arith.constant dense<0.000000e+00> : vector<8x8xf32>
    %126 = tpu.matmul %125, %109, %cst_38 {dimension_numbers = #tpu.dot_dimension_numbers<[1], [0], [0], [1], [0, 0, 1, 1], [], []>} : vector<8x8xbf16>, vector<8x8xbf16>, vector<8x8xf32> -> vector<8x8xf32>
    %127 = tpu.reciprocal %124 {approx = true} : vector<8x1xf32> -> vector<8x1xf32>
    %128 = vector.broadcast %127 : vector<8x1xf32> to vector<8x8xf32>
    %129 = arith.mulf %126, %128 : vector<8x8xf32>
    %130 = arith.truncf %129 : vector<8x8xf32> to vector<8x8xbf16>
    %131 = arith.index_cast %8 : i32 to index
    %c24_39 = arith.constant 24 : index
    %132 = vector.load %arg7[%131, %c24_39] : memref<8x32xbf16, #tpu.memory_space<vmem>>, vector<8x8xbf16>
    tpu.vector_store %arg7[%131, %c24_39], %130 {strides = array<i32>} : memref<8x32xbf16, #tpu.memory_space<vmem>>, vector<8x8xbf16>,
    %c1_i32_40 = arith.constant 1 : i32
    %c0_41 = arith.constant 0 : index
    %c0_42 = arith.constant 0 : index
    %133 = vector.load %arg7[%c0_41, %c0_42] : memref<8x32xbf16, #tpu.memory_space<vmem>>, vector<8x32xbf16>
    %c0_43 = arith.constant 0 : index
    %c0_44 = arith.constant 0 : index
    %134 = vector.load %arg3[%c0_43, %c0_44] : memref<32x32xbf16, #tpu.memory_space<vmem>>, vector<32x32xbf16>
    %cst_45 = arith.constant dense<0.000000e+00> : vector<8x32xf32>
    %135 = tpu.matmul %133, %134, %cst_45 {dimension_numbers = #tpu.dot_dimension_numbers<[1], [0], [0], [1], [0, 0, 1, 1], [], []>} : vector<8x32xbf16>, vector<32x32xbf16>, vector<8x32xf32> -> vector<8x32xf32>
    %c0_46 = arith.constant 0 : index
    %c0_47 = arith.constant 0 : index
    %136 = vector.load %arg4[%c0_46, %c0_47] : memref<1x32xf32, #tpu.memory_space<vmem>>, vector<1x32xf32>
    %137 = vector.broadcast %136 : vector<1x32xf32> to vector<8x32xf32>
    %138 = arith.addf %135, %137 : vector<8x32xf32>
    %c0_48 = arith.constant 0 : index
    %c0_49 = arith.constant 0 : index
    %139 = vector.load %arg5[%c0_48, %c0_49] : memref<8x32xf32, #tpu.memory_space<vmem>>, vector<8x32xf32>
    tpu.vector_store %arg5[%c0_48, %c0_49], %138 {strides = array<i32>} : memref<8x32xf32, #tpu.memory_space<vmem>>, vector<8x32xf32>,
    return
  }
  func.func @transform_0(%arg0: i32) -> (i32, i32) {
    %c0_i32 = arith.constant 0 : i32
    %c0_i32_0 = arith.constant 0 : i32
    return %arg0, %c0_i32 : i32, i32
  }
  func.func @transform_1(%arg0: i32) -> (i32, i32) {
    %c0_i32 = arith.constant 0 : i32
    %c0_i32_0 = arith.constant 0 : i32
    %c0_i32_1 = arith.constant 0 : i32
    return %c0_i32, %c0_i32_0 : i32, i32
  }
  func.func @transform_2(%arg0: i32) -> (i32, i32) {
    %c0_i32 = arith.constant 0 : i32
    %c0_i32_0 = arith.constant 0 : i32
    %c0_i32_1 = arith.constant 0 : i32
    return %c0_i32, %c0_i32_0 : i32, i32
  }
  func.func @transform_3(%arg0: i32) -> (i32, i32) {
    %c0_i32 = arith.constant 0 : i32
    %c0_i32_0 = arith.constant 0 : i32
    %c0_i32_1 = arith.constant 0 : i32
    return %c0_i32, %c0_i32_0 : i32, i32
  }
  func.func @transform_4(%arg0: i32) -> (i32, i32) {
    %c0_i32 = arith.constant 0 : i32
    %c0_i32_0 = arith.constant 0 : i32
    return %arg0, %c0_i32 : i32, i32
  }
}

</mosaic_0001>

<llo_original>
// kernel: tpu_custom_call.1
$region0: #{tpu_custom_call.1}
  #allocation0 [shape = 'u32[]', space=smem, size = 0x4, offset = 0x4, fixed_abs, tag = 'smem constant byte address 0x4 - core index']
  #allocation1 [shape = 'u32[72,128]{1,0:T(1,128)}', space=vmem, size = 0x9000, scoped, tag = 'internal scratch']
  #allocation2 [shape = 'bf16[8,96]{1,0:T(8,128)(2,1)}', space=vmem, size = 0x800, scoped, tag = 'scratch operand']
  #allocation3 [shape = 'bf16[8,32]{1,0:T(8,128)(2,1)}', space=vmem, size = 0x800, scoped, tag = 'scratch operand']
  %s0 = inlined_call_operand.hbm [shape: bf16[16,32], index: 0, kind: input, shape index: {}]
  %s1 = inlined_call_operand.hbm [shape: bf16[32,96], index: 1, kind: input, shape index: {}]
  %s2 = inlined_call_operand.hbm [shape: bf16[32,32], index: 2, kind: input, shape index: {}]
  %s3 = inlined_call_operand.vmem [shape: f32[1,32], index: 3, kind: input, shape index: {}]
  %s4 = inlined_call_operand.hbm [shape: f32[16,32], index: 4, kind: output, shape index: {}]
  %s5 = sld [smem:[#allocation0]]
  $region61: #{tpu_custom_call.1} parent=0
    _
  %s7 = ssub.s32 1, %s5
  %s8 = scalar_select 0, %s7, %s5
  $region1: #{tpu_custom_call.1} parent=0
    #allocation4 [shape = 'u8[4096]{0}', space=vmem, size = 0x1000, scoped, tag = 'input window, operand 0']
    #allocation5 [shape = 's32[2]{0}', space=sflag, size = 0x8, scoped, tag = 'scoped memory for tpu_custom_call.1']
    #allocation6 [shape = 's32[2]{0}', space=sflag, size = 0x8, scoped, tag = 'scoped memory for tpu_custom_call.1']
    #allocation7 [shape = 'u8[8192]{0}', space=vmem, size = 0x2000, scoped, tag = 'input window, operand 1, single buffered']
    #allocation8 [shape = 's32[1]{0}', space=sflag, size = 0x4, scoped, tag = 'scoped memory for tpu_custom_call.1']
    #allocation9 [shape = 'u8[8192]{0}', space=vmem, size = 0x2000, scoped, tag = 'input window, operand 2, single buffered']
    #allocation10 [shape = 'u8[8192]{0}', space=vmem, size = 0x2000, scoped, tag = 'output window, operand 0']
    %9 = vsyncpa [#allocation5], 0
    %s10 = scalar_lea.sflag [#allocation5], 1
    %11 = vsyncpa %s10, 0
    %12 = vsyncpa [#allocation8], 0
    %13 = vsyncpa [#allocation6], 0
    %s14 = scalar_lea.sflag [#allocation6], 1
    %15 = vsyncpa %s14, 0
    loop: start=0, step=1, limit=4
    $region2: #{tpu_custom_call.1} parent=1 // loop_pre_header
      _
    $region3: #{tpu_custom_call.1} parent=1 // loop_header
      %s17 = sphi 0, %s21
      %p18 = scmp.ge.s32.totalorder %s17, 4
      %s27 = sphi 0, %s29
      %s30 = sphi 0, %s27
      %s31 = sphi 0, %s30
      %s47 = sphi 0, %s31
      %s51 = sphi 0, %s51
      %s53 = sphi 0, %s51
      %s54 = sphi 0, %s53
      %s68 = sphi 0, %s54
      %s72 = sphi 0, %s72
      %s74 = sphi 0, %s72
      %s75 = sphi 0, %s74
      %s89 = sphi 0, %s75
      %s93 = sphi 0, %s93
      %s95 = sphi 0, %s93
      %s96 = sphi 0, %s95
      %s110 = sphi 0, %s96
      %s116 = sphi 0, %s118
      %s119 = sphi 0, %s116
      %s120 = sphi 0, %s119
      %s136 = sphi 0, %s120
    $region4: #{tpu_custom_call.1} parent=1 // loop_header_branch
      %20 = sbr.rel (%p18) target = $region8
    $region5: #{tpu_custom_call.1} parent=1 // loop_body
      %s22 = ssub.s32 %s17, 1
      %s23 = ssub.s32 %s17, 2
      %s24 = sadd.s32 %s17, 1
      %s25 = ssub.s32 %s17, %s24
      %p26 = scmp.eq.s32.totalorder %s25, 0
      %s28 = sadd.s32 %s27, 1
      %s29 = scalar_select %p26, %s27, %s28
      %p32 = pneg %p26
      %p33 = scmp.eq.s32.totalorder %s17, 1
      %p34 = por %p32, %p33
      %p35 = scmp.ne.s32.totalorder %s27, %s30
      %p36 = scmp.eq.s32.totalorder %s17, 0
      %p37 = por %p35, %p36
      %p38 = scmp.ne.s32.totalorder %s27, %s30
      %p39 = scmp.eq.s32.totalorder %s22, 1
      %p40 = por %p38, %p39
      %p41 = scmp.ne.s32.totalorder %s30, %s31
      %p42 = scmp.eq.s32.totalorder %s22, 0
      %p43 = por %p41, %p42
      %p44 = scmp.ne.s32.totalorder %s30, %s31
      %p45 = scmp.eq.s32.totalorder %s23, 1
      %p46 = por %p44, %p45
      %p48 = scmp.ne.s32.totalorder %s31, %s47
      %p49 = scmp.eq.s32.totalorder %s23, 0
      %p50 = por %p48, %p49
      %s52 = sadd.s32 %s51, 1
      %p55 = scmp.eq.s32.totalorder %s17, 1
      %p56 = scmp.ne.s32.totalorder %s51, %s53
      %p57 = scmp.eq.s32.totalorder %s17, 0
      %p58 = por %p56, %p57
      %p59 = scmp.ne.s32.totalorder %s51, %s53
      %p60 = scmp.eq.s32.totalorder %s22, 1
      %p61 = por %p59, %p60
      %p62 = scmp.ne.s32.totalorder %s53, %s54
      %p63 = scmp.eq.s32.totalorder %s22, 0
      %p64 = por %p62, %p63
      %p65 = scmp.ne.s32.totalorder %s53, %s54
      %p66 = scmp.eq.s32.totalorder %s23, 1
      %p67 = por %p65, %p66
      %p69 = scmp.ne.s32.totalorder %s54, %s68
      %p70 = scmp.eq.s32.totalorder %s23, 0
      %p71 = por %p69, %p70
      %s73 = sadd.s32 %s72, 1
      %p76 = scmp.eq.s32.totalorder %s17, 1
      %p77 = scmp.ne.s32.totalorder %s72, %s74
      %p78 = scmp.eq.s32.totalorder %s17, 0
      %p79 = por %p77, %p78
      %p80 = scmp.ne.s32.totalorder %s72, %s74
      %p81 = scmp.eq.s32.totalorder %s22, 1
      %p82 = por %p80, %p81
      %p83 = scmp.ne.s32.totalorder %s74, %s75
      %p84 = scmp.eq.s32.totalorder %s22, 0
      %p85 = por %p83, %p84
      %p86 = scmp.ne.s32.totalorder %s74, %s75
      %p87 = scmp.eq.s32.totalorder %s23, 1
      %p88 = por %p86, %p87
      %p90 = scmp.ne.s32.totalorder %s75, %s89
      %p91 = scmp.eq.s32.totalorder %s23, 0
      %p92 = por %p90, %p91
      %s94 = sadd.s32 %s93, 1
      %p97 = scmp.eq.s32.totalorder %s17, 1
      %p98 = scmp.ne.s32.totalorder %s93, %s95
      %p99 = scmp.eq.s32.totalorder %s17, 0
      %p100 = por %p98, %p99
      %p101 = scmp.ne.s32.totalorder %s93, %s95
      %p102 = scmp.eq.s32.totalorder %s22, 1
      %p103 = por %p101, %p102
      %p104 = scmp.ne.s32.totalorder %s95, %s96
      %p105 = scmp.eq.s32.totalorder %s22, 0
      %p106 = por %p104, %p105
      %p107 = scmp.ne.s32.totalorder %s95, %s96
      %p108 = scmp.eq.s32.totalorder %s23, 1
      %p109 = por %p107, %p108
      %p111 = scmp.ne.s32.totalorder %s96, %s110
      %p112 = scmp.eq.s32.totalorder %s23, 0
      %p113 = por %p111, %p112
      %s114 = ssub.s32 %s17, %s24
      %p115 = scmp.eq.s32.totalorder %s114, 0
      %s117 = sadd.s32 %s116, 1
      %s118 = scalar_select %p115, %s116, %s117
      %p121 = pneg %p115
      %p122 = scmp.eq.s32.totalorder %s17, 1
      %p123 = por %p121, %p122
      %p124 = scmp.ne.s32.totalorder %s116, %s119
      %p125 = scmp.eq.s32.totalorder %s17, 0
      %p126 = por %p124, %p125
      %p127 = scmp.ne.s32.totalorder %s116, %s119
      %p128 = scmp.eq.s32.totalorder %s22, 1
      %p129 = por %p127, %p128
      %p130 = scmp.ne.s32.totalorder %s119, %s120
      %p131 = scmp.eq.s32.totalorder %s22, 0
      %p132 = por %p130, %p131
      %p133 = scmp.ne.s32.totalorder %s119, %s120
      %p134 = scmp.eq.s32.totalorder %s23, 1
      %p135 = por %p133, %p134
      %p137 = scmp.ne.s32.totalorder %s120, %s136
      %p138 = scmp.eq.s32.totalorder %s23, 0
      %p139 = por %p137, %p138
      %p140 = scmp.le.s32.totalorder 1, %s17
      %p141 = scmp.lt.s32.totalorder %s17, 3
      %p142 = pnand %p140, %p141
      %p143 = pneg %p142
      // Predicated region
      $region9: #{tpu_custom_call.1} parent=5 // pred_check
        _
      $region10: #{tpu_custom_call.1} parent=5 // pred_check_branch
        %145 = sbr.rel (%p142) target = $region12
      $region11: #{tpu_custom_call.1} parent=5 // pred_region
        %s146 = ssub.s32 %s17, 1
        // Predicated region
        $region13: #{tpu_custom_call.1} parent=11 // pred_check
          %p147 = pneg %p64
        $region14: #{tpu_custom_call.1} parent=11 // pred_check_branch
          %149 = sbr.rel (%p147) target = $region16
        $region15: #{tpu_custom_call.1} parent=11 // pred_region
          %151 = vsyncadd [#allocation8], 0
          %s152 = sshll.u32 %s1, 4
          %s153 = int_to_ptr.hbm [resolvable:$true] %s152
          %s154 = sshll.u32 [#allocation7], 4
          %s155 = int_to_ptr.vmem [resolvable:$true] %s154
          %160 = dma.hbm_to_vmem [thread:$0]  %s153, 256, %s155, [#allocation8], 64, 64, 4
        $region16: #{tpu_custom_call.1} parent=11 // pred_fallthru
          _
        // Predicated region
        $region17: #{tpu_custom_call.1} parent=11 // pred_check
          %p161 = pneg %p85
        $region18: #{tpu_custom_call.1} parent=11 // pred_check_branch
          %163 = sbr.rel (%p161) target = $region20
        $region19: #{tpu_custom_call.1} parent=11 // pred_region
          %165 = vsyncadd [#allocation8], 0
          %s166 = sshll.u32 %s2, 4
          %s167 = int_to_ptr.hbm [resolvable:$true] %s166
          %s168 = sshll.u32 [#allocation9], 4
          %s169 = int_to_ptr.vmem [resolvable:$true] %s168
          %174 = dma.hbm_to_vmem [thread:$0]  %s167, 256, %s169, [#allocation8], 64, 64, 4
        $region20: #{tpu_custom_call.1} parent=11 // pred_fallthru
          _
        // Predicated region
        $region21: #{tpu_custom_call.1} parent=11 // pred_check
          %p175 = pneg %p106
        $region22: #{tpu_custom_call.1} parent=11 // pred_check_branch
          %177 = sbr.rel (%p175) target = $region24
        $region23: #{tpu_custom_call.1} parent=11 // pred_region
          _
        $region24: #{tpu_custom_call.1} parent=11 // pred_fallthru
          _
      $region12: #{tpu_custom_call.1} parent=5 // pred_fallthru
        _
      %p178 = scmp.lt.s32.totalorder %s17, 2
      // Predicated region
      $region25: #{tpu_custom_call.1} parent=5 // pred_check
        %p179 = pneg %p178
      $region26: #{tpu_custom_call.1} parent=5 // pred_check_branch
        %181 = sbr.rel (%p179) target = $region28
      $region27: #{tpu_custom_call.1} parent=5 // pred_region
        // Predicated region
        $region29: #{tpu_custom_call.1} parent=27 // pred_check
          %p182 = pneg %p37
        $region30: #{tpu_custom_call.1} parent=27 // pred_check_branch
          %184 = sbr.rel (%p182) target = $region32
        $region31: #{tpu_custom_call.1} parent=27 // pred_region
          %s185 = sand.u32 %s27, 1
          %s186 = scalar_lea.sflag [#allocation5], %s185
          %s187 = sand.u32 %s27, 1
          %s188 = smul.addr %s187, 4
          %s189 = scalar_lea.vmem [#allocation4], %s188
          %191 = vsyncadd %s186, 0
          %s192 = smul.addr %s17, 4
          %s193 = scalar_lea.hbm %s0, %s192
          %s195 = sshll.u32 %s193, 4
          %s196 = int_to_ptr.hbm [resolvable:$true] %s195
          %s197 = sshll.u32 %s189, 4
          %s198 = int_to_ptr.vmem [resolvable:$true] %s197
          %200 = dma.hbm_to_vmem [thread:$0]  %s196, 64, %s198, %s186
        $region32: #{tpu_custom_call.1} parent=27 // pred_fallthru
          _
      $region28: #{tpu_custom_call.1} parent=5 // pred_fallthru
        _
      %p201 = scmp.le.s32.totalorder 1, %s17
      %p202 = scmp.lt.s32.totalorder %s17, 3
      %p203 = pnand %p201, %p202
      %p204 = pneg %p203
      // Predicated region
      $region33: #{tpu_custom_call.1} parent=5 // pred_check
        _
      $region34: #{tpu_custom_call.1} parent=5 // pred_check_branch
        %206 = sbr.rel (%p203) target = $region36
      $region35: #{tpu_custom_call.1} parent=5 // pred_region
        %s207 = ssub.s32 %s17, 1
        %s208 = sand.u32 %s30, 1
        %s209 = scalar_lea.sflag [#allocation5], %s208
        %s210 = sand.u32 %s30, 1
        %s211 = smul.addr %s210, 4
        %s212 = scalar_lea.vmem [#allocation4], %s211
        // Predicated region
        $region37: #{tpu_custom_call.1} parent=35 // pred_check
          %p213 = pneg %p43
        $region38: #{tpu_custom_call.1} parent=35 // pred_check_branch
          %215 = sbr.rel (%p213) target = $region40
        $region39: #{tpu_custom_call.1} parent=35 // pred_region
          %217 = dma.done %s209, 64
        $region40: #{tpu_custom_call.1} parent=35 // pred_fallthru
          _
        // Predicated region
        $region41: #{tpu_custom_call.1} parent=35 // pred_check
          %p218 = pneg %p64
        $region42: #{tpu_custom_call.1} parent=35 // pred_check_branch
          %220 = sbr.rel (%p218) target = $region44
        $region43: #{tpu_custom_call.1} parent=35 // pred_region
          %222 = dma.done [#allocation8], 256
        $region44: #{tpu_custom_call.1} parent=35 // pred_fallthru
          _
        // Predicated region
        $region45: #{tpu_custom_call.1} parent=35 // pred_check
          %p223 = pneg %p85
        $region46: #{tpu_custom_call.1} parent=35 // pred_check_branch
          %225 = sbr.rel (%p223) target = $region48
        $region47: #{tpu_custom_call.1} parent=35 // pred_region
          %227 = dma.done [#allocation8], 256
        $region48: #{tpu_custom_call.1} parent=35 // pred_fallthru
          _
        %s228 = sand.u32 %s30, 1
        %s229 = scalar_lea.sflag [#allocation5], %s228
        %s230 = sand.u32 %s30, 1
        %s231 = smul.addr %s230, 4
        %s232 = scalar_lea.vmem [#allocation4], %s231
        %p233 = pneg %p43
        %p234 = pneg %p40
        %p235 = pneg %p64
        %p236 = pneg %p61
        %p237 = pneg %p85
        %p238 = pneg %p82
        %p239 = pneg %p106
        %p240 = pneg %p103
        %p241 = pneg %p132
        %p242 = pneg %p129
        %s243 = sand.u32 %s119, 1
        %s244 = scalar_lea.sflag [#allocation6], %s243
        %s245 = sand.u32 %s119, 1
        %s246 = smul.addr %s245, 8
        %s247 = scalar_lea.vmem [#allocation10], %s246
        %v249 = vld [vmem:[%s212] sm:$0xf]
        %v250 = vld [vmem:[#allocation7] sm:$0xf]
        %v251 = vld [vmem:[#allocation7 + $0x4] sm:$0xf]
        %v252 = vld [vmem:[#allocation7 + $0x8] sm:$0xf]
        %v253 = vld [vmem:[#allocation7 + $0xc] sm:$0xf]
        %v258 = vunpack.c.l.b16 %v250
        %v259 = vunpack.c.l.b16 %v251
        %v260 = vunpack.c.l.b16 %v252
        %v261 = vunpack.c.l.b16 %v253
        %v262 = vpack.c.b16 %v259, %v258
        %v263 = vpack.c.b16 %v261, %v260
        %vm266 = vcmask 261120
        %v268 = vsel %vm266, %v249, 0
        %270 = vmatpush.bf16.msra.mxu0 0
        %271 = vmatpush.bf16.msra.mxu0 0
        %272 = vmatpush.bf16.msra.mxu0 0
        %273 = vmatpush.bf16.msra.mxu0 0
        %274 = vmatpush.bf16.msra.mxu0 0
        %275 = vmatpush.bf16.msra.mxu0 0
        %276 = vmatpush.bf16.msra.mxu0 %v263
        %277 = vmatpush.bf16.msra.mxu0 %v262
        %278 = vmatmul.bf16.gmra.mxu0 %v268
        %v279 = vpop.f32.mrf.mxu0
        %v280 = vadd.f32 0.0, %v279
        %v281 = vpop.f32.mrf.mxu0
        %282 = vdwg.mxu0
        %v283 = vpack.c.bf16 %v280, %v280
        %vm284 = vcmask 781312
        %285 = vst.msk [vmem:[#allocation2] sm:$0xf] %vm284, %v283
        %v286 = vld [vmem:[#allocation2] sm:$0xf]
        %v288 = vunpack.c.l.b16 %v286
        %v289 = vpack.c.b16 %v288, %v288
        %290 = vrot.lane.b32.xlu0 %v289, 96
        %v291 = vpop.permute.xlu0 %290
        %vm292 = vcmask 64512
        %v294 = vsel %vm292, %v286, 0
        %v297 = vsel %vm292, %v291, 0
        %299 = vmatpush.bf16.xpose.msra.mxu0 0
        %300 = vmatpush.bf16.xpose.msra.mxu0 0
        %301 = vmatpush.bf16.xpose.msra.mxu0 0
        %302 = vmatpush.bf16.xpose.msra.mxu0 0
        %303 = vmatpush.bf16.xpose.msra.mxu0 0
        %304 = vmatpush.bf16.xpose.msra.mxu0 0
        %305 = vmatpush.bf16.xpose.msra.mxu0 0
        %306 = vmatpush.bf16.xpose.msra.mxu0 %v297
        %307 = vmatmul.bf16.gmra.mxu0 %v294
        %v308 = vpop.f32.mrf.mxu0
        %v309 = vadd.f32 0.0, %v308
        %v310 = vpop.f32.mrf.mxu0
        %311 = vdwg.mxu0
        %v312 = vlaneseq
        %v313 = vshrl.u32 %v312, 7
        %v314 = vlaneseq
        %v315 = vand.u32 %v314, 127
        %vm316 = vcmp.gt.s32.totalorder %v315, %v313
        %v317 = vsel %vm316, -1e+30, %v309
        %v318 = vsel %vm292, %v317, -inf
        %319 = vmax.xlane.f32.xlu0 %v318
        %v320 = vpop.xlane.xlu0 %319
        %v321 = vsub.f32 %v317, %v320
        %v322 = vmul.f32 %v321, 1.442695
        %v323 = vpow.pop %v322
        %v324 = vsel %vm292, %v323, 0.0
        %325 = vadd.xlane.f32.xlu0 %v324
        %v326 = vpop.xlane.xlu0 %325
        %v327 = vpack.c.bf16 %v323, %v323
        %328 = vrot.lane.b32.xlu0 %v289, 64
        %v329 = vpop.permute.xlu0 %328
        %v331 = vsel %vm292, %v327, 0
        %vm333 = vcmask 1043456
        %v335 = vsel %vm333, %v329, 0
        %337 = vmatpush.bf16.msra.mxu0 0
        %338 = vmatpush.bf16.msra.mxu0 0
        %339 = vmatpush.bf16.msra.mxu0 0
        %340 = vmatpush.bf16.msra.mxu0 0
        %341 = vmatpush.bf16.msra.mxu0 0
        %342 = vmatpush.bf16.msra.mxu0 0
        %343 = vmatpush.bf16.msra.mxu0 0
        %344 = vmatpush.bf16.msra.mxu0 %v335
        %345 = vmatmul.bf16.gmra.mxu0 %v331
        %v346 = vpop.f32.mrf.mxu0
        %v347 = vadd.f32 0.0, %v346
        %v348 = vpop.f32.mrf.mxu0
        %349 = vdwg.mxu0
        %v350 = vrcp.pop %v326
        %v351 = vmul.f32 %v347, %v350
        %v352 = vpack.c.bf16 %v351, %v351
        %vm353 = vcmask 60416
        %354 = vst.msk [vmem:[#allocation3] sm:$0xf] %vm353, %v352
        %v355 = vld [vmem:[#allocation2] sm:$0xf]
        %v357 = vunpack.c.l.b16 %v355
        %v358 = vpack.c.b16 %v357, %v357
        %359 = vrot.lane.b32.xlu0 %v358, 120
        %v360 = vpop.permute.xlu0 %359
        %361 = vrot.lane.b32.xlu0 %v358, 88
        %v362 = vpop.permute.xlu0 %361
        %v364 = vsel %vm292, %v360, 0
        %v367 = vsel %vm292, %v362, 0
        %369 = vmatpush.bf16.xpose.msra.mxu0 0
        %370 = vmatpush.bf16.xpose.msra.mxu0 0
        %371 = vmatpush.bf16.xpose.msra.mxu0 0
        %372 = vmatpush.bf16.xpose.msra.mxu0 0
        %373 = vmatpush.bf16.xpose.msra.mxu0 0
        %374 = vmatpush.bf16.xpose.msra.mxu0 0
        %375 = vmatpush.bf16.xpose.msra.mxu0 0
        %376 = vmatpush.bf16.xpose.msra.mxu0 %v367
        %377 = vmatmul.bf16.gmra.mxu0 %v364
        %v378 = vpop.f32.mrf.mxu0
        %v379 = vadd.f32 0.0, %v378
        %v380 = vpop.f32.mrf.mxu0
        %381 = vdwg.mxu0
        %v382 = vsel %vm316, -1e+30, %v379
        %v383 = vsel %vm292, %v382, -inf
        %384 = vmax.xlane.f32.xlu0 %v383
        %v385 = vpop.xlane.xlu0 %384
        %v386 = vsub.f32 %v382, %v385
        %v387 = vmul.f32 %v386, 1.442695
        %v388 = vpow.pop %v387
        %v389 = vsel %vm292, %v388, 0.0
        %390 = vadd.xlane.f32.xlu0 %v389
        %v391 = vpop.xlane.xlu0 %390
        %v392 = vpack.c.bf16 %v388, %v388
        %393 = vrot.lane.b32.xlu0 %v358, 56
        %v394 = vpop.permute.xlu0 %393
        %v396 = vsel %vm292, %v392, 0
        %v399 = vsel %vm333, %v394, 0
        %401 = vmatpush.bf16.msra.mxu0 0
        %402 = vmatpush.bf16.msra.mxu0 0
        %403 = vmatpush.bf16.msra.mxu0 0
        %404 = vmatpush.bf16.msra.mxu0 0
        %405 = vmatpush.bf16.msra.mxu0 0
        %406 = vmatpush.bf16.msra.mxu0 0
        %407 = vmatpush.bf16.msra.mxu0 0
        %408 = vmatpush.bf16.msra.mxu0 %v399
        %409 = vmatmul.bf16.gmra.mxu0 %v396
        %v410 = vpop.f32.mrf.mxu0
        %v411 = vadd.f32 0.0, %v410
        %v412 = vpop.f32.mrf.mxu0
        %413 = vdwg.mxu0
        %v414 = vrcp.pop %v391
        %v415 = vmul.f32 %v411, %v414
        %v416 = vpack.c.bf16 %v415, %v415
        %418 = vrot.lane.b32.xlu0 %v416, 8
        %v419 = vpop.permute.xlu0 %418
        %vm421 = vcmask 126016
        %422 = vst.msk [vmem:[#allocation3] sm:$0xf] %vm421, %v419
        %v423 = vld [vmem:[#allocation2] sm:$0xf]
        %v425 = vunpack.c.l.b16 %v423
        %v426 = vpack.c.b16 %v425, %v425
        %427 = vrot.lane.b32.xlu0 %v426, 112
        %v428 = vpop.permute.xlu0 %427
        %429 = vrot.lane.b32.xlu0 %v426, 80
        %v430 = vpop.permute.xlu0 %429
        %v432 = vsel %vm292, %v428, 0
        %v435 = vsel %vm292, %v430, 0
        %437 = vmatpush.bf16.xpose.msra.mxu0 0
        %438 = vmatpush.bf16.xpose.msra.mxu0 0
        %439 = vmatpush.bf16.xpose.msra.mxu0 0
        %440 = vmatpush.bf16.xpose.msra.mxu0 0
        %441 = vmatpush.bf16.xpose.msra.mxu0 0
        %442 = vmatpush.bf16.xpose.msra.mxu0 0
        %443 = vmatpush.bf16.xpose.msra.mxu0 0
        %444 = vmatpush.bf16.xpose.msra.mxu0 %v435
        %445 = vmatmul.bf16.gmra.mxu0 %v432
        %v446 = vpop.f32.mrf.mxu0
        %v447 = vadd.f32 0.0, %v446
        %v448 = vpop.f32.mrf.mxu0
        %449 = vdwg.mxu0
        %v450 = vsel %vm316, -1e+30, %v447
        %v451 = vsel %vm292, %v450, -inf
        %452 = vmax.xlane.f32.xlu0 %v451
        %v453 = vpop.xlane.xlu0 %452
        %v454 = vsub.f32 %v450, %v453
        %v455 = vmul.f32 %v454, 1.442695
        %v456 = vpow.pop %v455
        %v457 = vsel %vm292, %v456, 0.0
        %458 = vadd.xlane.f32.xlu0 %v457
        %v459 = vpop.xlane.xlu0 %458
        %v460 = vpack.c.bf16 %v456, %v456
        %461 = vrot.lane.b32.xlu0 %v426, 48
        %v462 = vpop.permute.xlu0 %461
        %v464 = vsel %vm292, %v460, 0
        %v467 = vsel %vm333, %v462, 0
        %469 = vmatpush.bf16.msra.mxu0 0
        %470 = vmatpush.bf16.msra.mxu0 0
        %471 = vmatpush.bf16.msra.mxu0 0
        %472 = vmatpush.bf16.msra.mxu0 0
        %473 = vmatpush.bf16.msra.mxu0 0
        %474 = vmatpush.bf16.msra.mxu0 0
        %475 = vmatpush.bf16.msra.mxu0 0
        %476 = vmatpush.bf16.msra.mxu0 %v467
        %477 = vmatmul.bf16.gmra.mxu0 %v464
        %v478 = vpop.f32.mrf.mxu0
        %v479 = vadd.f32 0.0, %v478
        %v480 = vpop.f32.mrf.mxu0
        %481 = vdwg.mxu0
        %v482 = vrcp.pop %v459
        %v483 = vmul.f32 %v479, %v482
        %v484 = vpack.c.bf16 %v483, %v483
        %486 = vrot.lane.b32.xlu0 %v484, 16
        %v487 = vpop.permute.xlu0 %486
        %vm489 = vcmask 191616
        %490 = vst.msk [vmem:[#allocation3] sm:$0xf] %vm489, %v487
        %v491 = vld [vmem:[#allocation2] sm:$0xf]
        %v493 = vunpack.c.l.b16 %v491
        %v494 = vpack.c.b16 %v493, %v493
        %495 = vrot.lane.b32.xlu0 %v494, 104
        %v496 = vpop.permute.xlu0 %495
        %497 = vrot.lane.b32.xlu0 %v494, 72
        %v498 = vpop.permute.xlu0 %497
        %v500 = vsel %vm292, %v496, 0
        %v503 = vsel %vm292, %v498, 0
        %505 = vmatpush.bf16.xpose.msra.mxu0 0
        %506 = vmatpush.bf16.xpose.msra.mxu0 0
        %507 = vmatpush.bf16.xpose.msra.mxu0 0
        %508 = vmatpush.bf16.xpose.msra.mxu0 0
        %509 = vmatpush.bf16.xpose.msra.mxu0 0
        %510 = vmatpush.bf16.xpose.msra.mxu0 0
        %511 = vmatpush.bf16.xpose.msra.mxu0 0
        %512 = vmatpush.bf16.xpose.msra.mxu0 %v503
        %513 = vmatmul.bf16.gmra.mxu0 %v500
        %v514 = vpop.f32.mrf.mxu0
        %v515 = vadd.f32 0.0, %v514
        %v516 = vpop.f32.mrf.mxu0
        %517 = vdwg.mxu0
        %v518 = vsel %vm316, -1e+30, %v515
        %v519 = vsel %vm292, %v518, -inf
        %520 = vmax.xlane.f32.xlu0 %v519
        %v521 = vpop.xlane.xlu0 %520
        %v522 = vsub.f32 %v518, %v521
        %v523 = vmul.f32 %v522, 1.442695
        %v524 = vpow.pop %v523
        %v525 = vsel %vm292, %v524, 0.0
        %526 = vadd.xlane.f32.xlu0 %v525
        %v527 = vpop.xlane.xlu0 %526
        %v528 = vpack.c.bf16 %v524, %v524
        %529 = vrot.lane.b32.xlu0 %v494, 40
        %v530 = vpop.permute.xlu0 %529
        %v532 = vsel %vm292, %v528, 0
        %v535 = vsel %vm333, %v530, 0
        %537 = vmatpush.bf16.msra.mxu0 0
        %538 = vmatpush.bf16.msra.mxu0 0
        %539 = vmatpush.bf16.msra.mxu0 0
        %540 = vmatpush.bf16.msra.mxu0 0
        %541 = vmatpush.bf16.msra.mxu0 0
        %542 = vmatpush.bf16.msra.mxu0 0
        %543 = vmatpush.bf16.msra.mxu0 0
        %544 = vmatpush.bf16.msra.mxu0 %v535
        %545 = vmatmul.bf16.gmra.mxu0 %v532
        %v546 = vpop.f32.mrf.mxu0
        %v547 = vadd.f32 0.0, %v546
        %v548 = vpop.f32.mrf.mxu0
        %549 = vdwg.mxu0
        %v550 = vrcp.pop %v527
        %v551 = vmul.f32 %v547, %v550
        %v552 = vpack.c.bf16 %v551, %v551
        %554 = vrot.lane.b32.xlu0 %v552, 24
        %v555 = vpop.permute.xlu0 %554
        %vm557 = vcmask 257216
        %558 = vst.msk [vmem:[#allocation3] sm:$0xf] %vm557, %v555
        %v559 = vld [vmem:[#allocation3] sm:$0xf]
        %v560 = vld [vmem:[#allocation9] sm:$0xf]
        %v561 = vld [vmem:[#allocation9 + $0x4] sm:$0xf]
        %v562 = vld [vmem:[#allocation9 + $0x8] sm:$0xf]
        %v563 = vld [vmem:[#allocation9 + $0xc] sm:$0xf]
        %v564 = vld [vmem:[%s3] sm:$0x1]
        %v566 = vperm.slane %v564, 0
        %v572 = vunpack.c.l.b16 %v560
        %v573 = vunpack.c.l.b16 %v561
        %v574 = vunpack.c.l.b16 %v562
        %v575 = vunpack.c.l.b16 %v563
        %v576 = vpack.c.b16 %v573, %v572
        %v577 = vpack.c.b16 %v575, %v574
        %v581 = vsel %vm266, %v559, 0
        %583 = vmatpush.bf16.msra.mxu0 0
        %584 = vmatpush.bf16.msra.mxu0 0
        %585 = vmatpush.bf16.msra.mxu0 0
        %586 = vmatpush.bf16.msra.mxu0 0
        %587 = vmatpush.bf16.msra.mxu0 0
        %588 = vmatpush.bf16.msra.mxu0 0
        %589 = vmatpush.bf16.msra.mxu0 %v577
        %590 = vmatpush.bf16.msra.mxu0 %v576
        %591 = vmatmul.bf16.gmra.mxu0 %v581
        %v592 = vpop.f32.mrf.mxu0
        %v593 = vadd.f32 %v566, %v592
        %v594 = vpop.f32.mrf.mxu0
        %595 = vdwg.mxu0
        %596 = vst.msk [vmem:[%s247] sm:$0xff] %vm266, %v593
        %s597 = sand.u32 %s119, 1
        %s598 = scalar_lea.sflag [#allocation6], %s597
        %s599 = sand.u32 %s119, 1
        %s600 = smul.addr %s599, 8
        %s601 = scalar_lea.vmem [#allocation10], %s600
        // Predicated region
        $region49: #{tpu_custom_call.1} parent=35 // pred_check
          %p602 = pneg %p129
        $region50: #{tpu_custom_call.1} parent=35 // pred_check_branch
          %604 = sbr.rel (%p602) target = $region52
        $region51: #{tpu_custom_call.1} parent=35 // pred_region
          %606 = vsyncadd %s598, 0
          %s607 = smul.addr %s22, 8
          %s608 = scalar_lea.hbm %s4, %s607
          %s610 = sshll.u32 %s601, 4
          %s611 = int_to_ptr.vmem [resolvable:$true] %s610
          %s612 = sshll.u32 %s608, 4
          %s613 = int_to_ptr.hbm [resolvable:$true] %s612
          %615 = dma.vmem_to_hbm [thread:$0]  %s611, 128, %s613, %s598
        $region52: #{tpu_custom_call.1} parent=35 // pred_fallthru
          _
      $region36: #{tpu_custom_call.1} parent=5 // pred_fallthru
        _
      %p616 = scmp.le.s32.totalorder 2, %s17
      // Predicated region
      $region53: #{tpu_custom_call.1} parent=5 // pred_check
        %p617 = pneg %p616
      $region54: #{tpu_custom_call.1} parent=5 // pred_check_branch
        %619 = sbr.rel (%p617) target = $region56
      $region55: #{tpu_custom_call.1} parent=5 // pred_region
        %s620 = ssub.s32 %s17, 2
        // Predicated region
        $region57: #{tpu_custom_call.1} parent=55 // pred_check
          %p621 = pneg %p135
        $region58: #{tpu_custom_call.1} parent=55 // pred_check_branch
          %623 = sbr.rel (%p621) target = $region60
        $region59: #{tpu_custom_call.1} parent=55 // pred_region
          %s624 = sand.u32 %s120, 1
          %s625 = scalar_lea.sflag [#allocation6], %s624
          %s626 = sand.u32 %s120, 1
          %s627 = smul.addr %s626, 8
          %s628 = scalar_lea.vmem [#allocation10], %s627
          %630 = dma.done %s625, 128
        $region60: #{tpu_custom_call.1} parent=55 // pred_fallthru
          _
      $region56: #{tpu_custom_call.1} parent=5 // pred_fallthru
        _
    $region6: #{tpu_custom_call.1} parent=1 // loop_footer
      %s21 = sadd.s32 1, %s17
    $region7: #{tpu_custom_call.1} parent=1 // loop_footer_branch
      %16 = sbr.rel target = $region3
    $region8: #{tpu_custom_call.1} parent=1 // loop_exit
      _
    %631 = vsyncpa [#allocation5], 1
    %s632 = scalar_lea.sflag [#allocation5], 1
    %633 = vsyncpa %s632, 1
    %634 = vsyncpa [#allocation8], 1
    %635 = vsyncpa [#allocation6], 1
    %s636 = scalar_lea.sflag [#allocation6], 1
    %637 = vsyncpa %s636, 1

</llo_original>
